<compile_context>
chip_gen: v7x
topology: tpu7x:2x2x1
jax: 0.10.0
libtpu: 0.0.40
codegen_flags: <defaults>
</compile_context>

<pallas_src>
import jax
import jax.numpy as jnp
from jax.experimental import pallas as pl
from jax.experimental.pallas import tpu as pltpu


def _round_up(x: int, m: int) -> int:
    return (x + m - 1) // m * m


def value_net_kernel(x_ref, w1_ref, b1_ref, w2_ref, b2_ref, o_ref):
    # x_ref:  (4, TB) VMEM    w1_ref: (H, 4) VMEM    b1_ref: (H, 1) VMEM
    # w2_ref: (H, 1)  VMEM    b2_ref: (1, 1) SMEM    o_ref:  (1, TB) VMEM
    x = x_ref[...]                               # (4, TB)
    w1 = w1_ref[...]                             # (H, 4)

    # Layer 1: hidden = W1 @ x + b1.  K=4 -> 4 unrolled broadcast FMAs on the
    # VPU (outer-product style); keep this off the MXU.
    h = b1_ref[...]                              # (H, 1), broadcasts to (H, TB)
    for k in range(x_ref.shape[0]):              # static 4-way unroll
        h = h + w1[:, k:k + 1] * x[k:k + 1, :]
    h = jnp.maximum(h, 0.0)                      # ReLU (f32 VPU)

    # Layer 2: out = w2 @ h + b2 == sum_H(w2_col * h) + b2 (XLU sublane reduce).
    out = jnp.sum(h * w2_ref[...], axis=0, keepdims=True) + b2_ref[0, 0]
    o_ref[...] = out.astype(o_ref.dtype)         # (1, TB) lane-dense store


def _pick_tile(batch: int, block_b: int):
    """Lane tile (multiple of 128, never larger than the batch) + grid size."""
    if batch < 128:
        return batch, 1                          # one block == full array
    tb = min(_round_up(block_b, 128), (batch // 128) * 128)
    grid_b = pl.cdiv(batch, tb)
    # v7x megacore: prefer an even step count so both TCs get equal work;
    # harmless (grid stays valid) on single-TC v5e/v6e.
    if grid_b > 1 and grid_b % 2 == 1:
        cand = max(_round_up(pl.cdiv(batch, grid_b + 1), 128), 128)
        if pl.cdiv(batch, cand) % 2 == 0:
            tb = cand
        grid_b = pl.cdiv(batch, tb)
    return tb, grid_b


def value_net_forward(x, w1, b1, w2, b2, *, block_b: int = 65536,
                      min_pallas_batch: int = 2048):
    """x: (B, 4); w1: (H, 4); b1: (H,); w2: (1, H); b2: (1,) -> (B, 1)."""
    B = x.shape[0]
    H = w1.shape[0]

    if B < min_pallas_batch:
        # Tiny batches: launch/relayout overhead dwarfs the <1k FLOPs of
        # work -> let XLA fuse the two matmuls instead.
        h = jnp.maximum(x @ w1.T + b1, 0.0)
        return h @ w2.T + b2

    tb, grid_b = _pick_tile(B, block_b)

    # Single relayout pass (batch -> lanes); no pad, ragged last block is
    # handled by Pallas masking the out-of-bounds output writes.
    x_t = x.T                                    # (4, B)
    b1_col = b1.reshape(H, 1)                    # (H, 1)
    w2_col = w2.T                                # (H, 1)
    b2_sc = b2.reshape(1, 1)                     # (1, 1) -> SMEM scalar

    flops = 2 * B * H * (4 + 1)
    bytes_accessed = 4 * (4 * B + B + 4 * H + 2 * H + 1)

    out = pl.pallas_call(
        value_net_kernel,
        out_shape=jax.ShapeDtypeStruct((1, B), x.dtype),
        grid=(grid_b,),
        in_specs=[
            pl.BlockSpec((4, tb), lambda i: (0, i),
                         memory_space=pltpu.MemorySpace.VMEM),
            # Constant index maps: weights/biases stay resident, no re-DMA.
            pl.BlockSpec((H, 4), lambda i: (0, 0),
                         memory_space=pltpu.MemorySpace.VMEM),
            pl.BlockSpec((H, 1), lambda i: (0, 0),
                         memory_space=pltpu.MemorySpace.VMEM),
            pl.BlockSpec((H, 1), lambda i: (0, 0),
                         memory_space=pltpu.MemorySpace.VMEM),
            pl.BlockSpec(memory_space=pltpu.MemorySpace.SMEM),
        ],
        out_specs=pl.BlockSpec((1, tb), lambda i: (0, i),
                               memory_space=pltpu.MemorySpace.VMEM),
        compiler_params=pltpu.CompilerParams(
            dimension_semantics=("parallel",)),
        cost_estimate=pl.CostEstimate(
            flops=flops, transcendentals=0, bytes_accessed=bytes_accessed),
    )(x_t, w1, b1_col, w2_col, b2_sc)

    return out.reshape(B, 1)                     # contiguous (1,B)->(B,1), free


def reference_forward(x, w1, b1, w2, b2):
    h = jnp.maximum(x @ w1.T + b1, 0.0)
    return h @ w2.T + b2


if __name__ == "__main__":
    hidden_dim = 16

    key = jax.random.PRNGKey(0)
    k_x, k_w1, k_b1, k_w2, k_b2 = jax.random.split(key, 5)

    # Deterministic synthetic parameters (same shapes as the nn.Linear layers).
    w1 = jax.random.normal(k_w1, (hidden_dim, 4), dtype=jnp.float32) * 0.5
    b1 = jax.random.normal(k_b1, (hidden_dim,), dtype=jnp.float32) * 0.1
    w2 = jax.random.normal(k_w2, (1, hidden_dim), dtype=jnp.float32) * 0.25
    b2 = jax.random.normal(k_b2, (1,), dtype=jnp.float32) * 0.1

    # 1) Small batch forced through the Pallas kernel (single full-array block).
    x_small = jax.random.normal(k_x, (8, 4), dtype=jnp.float32)
    out = value_net_forward(x_small, w1, b1, w2, b2, min_pallas_batch=0)
    jax.block_until_ready(out)
    ref = reference_forward(x_small, w1, b1, w2, b2)
    assert out.shape == (8, 1)
    assert jnp.allclose(out, ref, atol=1e-5, rtol=1e-5)

    # 2) Same small batch through the default path (XLA fallback for tiny B).
    out_fb = value_net_forward(x_small, w1, b1, w2, b2)
    jax.block_until_ready(out_fb)
    assert jnp.allclose(out_fb, ref, atol=1e-5, rtol=1e-5)

    # 3) Batch at the default Pallas threshold (single 2048-lane tile).
    x_mid = jax.random.normal(jax.random.PRNGKey(1), (2048, 4), dtype=jnp.float32)
    out_mid = value_net_forward(x_mid, w1, b1, w2, b2)
    jax.block_until_ready(out_mid)
    ref_mid = reference_forward(x_mid, w1, b1, w2, b2)
    assert out_mid.shape == (2048, 1)
    assert jnp.allclose(out_mid, ref_mid, atol=1e-5, rtol=1e-5)

    # 4) Ragged multi-tile grid (B=3000, small block_b -> even grid, masked
    #    writes on the ragged last block).
    x_big = jax.random.normal(jax.random.PRNGKey(2), (3000, 4), dtype=jnp.float32)
    out_big = value_net_forward(x_big, w1, b1, w2, b2, block_b=1024,
                                min_pallas_batch=0)
    jax.block_until_ready(out_big)
    ref_big = reference_forward(x_big, w1, b1, w2, b2)
    assert out_big.shape == (3000, 1)
    assert jnp.allclose(out_big, ref_big, atol=1e-5, rtol=1e-5)

    print("KERNEL_OK")
</pallas_src>

<mosaic_0001>
module attributes {stable_mosaic.version = 11 : i64} {
  func.func @value_net_kernel(%arg0: i32, %arg1: memref<4x8xf32, #tpu.memory_space<vmem>>, %arg2: memref<16x4xf32, #tpu.memory_space<vmem>>, %arg3: memref<16x1xf32, #tpu.memory_space<vmem>>, %arg4: memref<16x1xf32, #tpu.memory_space<vmem>>, %arg5: memref<1x1xf32, #tpu.memory_space<smem>>, %arg6: memref<1x8xf32, #tpu.memory_space<vmem>>) attributes {dimension_semantics = [#tpu.dimension_semantics<parallel>], iteration_bounds = array<i64: 1>, scalar_prefetch = 0 : i64, scratch_operands = 0 : i64, tpu.core_type = #tpu.core_type<tc>, window_params = [{transform_indices = @transform_0, window_bounds = array<i64: 4, 8>}, {pipeline_mode = #tpu.pipeline_mode<synchronous>, transform_indices = @transform_1, window_bounds = array<i64: 16, 4>}, {pipeline_mode = #tpu.pipeline_mode<synchronous>, transform_indices = @transform_2, window_bounds = array<i64: 16, 1>}, {pipeline_mode = #tpu.pipeline_mode<synchronous>, transform_indices = @transform_3, window_bounds = array<i64: 16, 1>}, {transform_indices = @transform_4, window_bounds = array<i64: 1, 1>}, {transform_indices = @transform_5, window_bounds = array<i64: 1, 8>}]} {
    %c0 = arith.constant 0 : index
    %c0_0 = arith.constant 0 : index
    %0 = vector.load %arg1[%c0, %c0_0] : memref<4x8xf32, #tpu.memory_space<vmem>>, vector<4x8xf32>
    %c0_1 = arith.constant 0 : index
    %c0_2 = arith.constant 0 : index
    %1 = vector.load %arg2[%c0_1, %c0_2] : memref<16x4xf32, #tpu.memory_space<vmem>>, vector<16x4xf32>
    %c0_3 = arith.constant 0 : index
    %c0_4 = arith.constant 0 : index
    %2 = vector.load %arg3[%c0_3, %c0_4] : memref<16x1xf32, #tpu.memory_space<vmem>>, vector<16x1xf32>
    %3 = vector.extract_strided_slice %1 {offsets = [0, 0], sizes = [16, 1], strides = [1, 1]} : vector<16x4xf32> to vector<16x1xf32>
    %4 = vector.extract_strided_slice %0 {offsets = [0, 0], sizes = [1, 8], strides = [1, 1]} : vector<4x8xf32> to vector<1x8xf32>
    %5 = vector.broadcast %3 : vector<16x1xf32> to vector<16x8xf32>
    %6 = vector.broadcast %4 : vector<1x8xf32> to vector<16x8xf32>
    %7 = arith.mulf %5, %6 : vector<16x8xf32>
    %8 = vector.broadcast %2 : vector<16x1xf32> to vector<16x8xf32>
    %9 = arith.addf %8, %7 : vector<16x8xf32>
    %10 = vector.extract_strided_slice %1 {offsets = [0, 1], sizes = [16, 1], strides = [1, 1]} : vector<16x4xf32> to vector<16x1xf32>
    %11 = vector.extract_strided_slice %0 {offsets = [1, 0], sizes = [1, 8], strides = [1, 1]} : vector<4x8xf32> to vector<1x8xf32>
    %12 = vector.broadcast %10 : vector<16x1xf32> to vector<16x8xf32>
    %13 = vector.broadcast %11 : vector<1x8xf32> to vector<16x8xf32>
    %14 = arith.mulf %12, %13 : vector<16x8xf32>
    %15 = arith.addf %9, %14 : vector<16x8xf32>
    %16 = vector.extract_strided_slice %1 {offsets = [0, 2], sizes = [16, 1], strides = [1, 1]} : vector<16x4xf32> to vector<16x1xf32>
    %17 = vector.extract_strided_slice %0 {offsets = [2, 0], sizes = [1, 8], strides = [1, 1]} : vector<4x8xf32> to vector<1x8xf32>
    %18 = vector.broadcast %16 : vector<16x1xf32> to vector<16x8xf32>
    %19 = vector.broadcast %17 : vector<1x8xf32> to vector<16x8xf32>
    %20 = arith.mulf %18, %19 : vector<16x8xf32>
    %21 = arith.addf %15, %20 : vector<16x8xf32>
    %22 = vector.extract_strided_slice %1 {offsets = [0, 3], sizes = [16, 1], strides = [1, 1]} : vector<16x4xf32> to vector<16x1xf32>
    %23 = vector.extract_strided_slice %0 {offsets = [3, 0], sizes = [1, 8], strides = [1, 1]} : vector<4x8xf32> to vector<1x8xf32>
    %24 = vector.broadcast %22 : vector<16x1xf32> to vector<16x8xf32>
    %25 = vector.broadcast %23 : vector<1x8xf32> to vector<16x8xf32>
    %26 = arith.mulf %24, %25 : vector<16x8xf32>
    %27 = arith.addf %21, %26 : vector<16x8xf32>
    %cst = arith.constant 0.000000e+00 : f32
    %28 = vector.broadcast %cst : f32 to vector<16x8xf32>
    %29 = arith.maximumf %27, %28 : vector<16x8xf32>
    %c0_5 = arith.constant 0 : index
    %c0_6 = arith.constant 0 : index
    %30 = vector.load %arg4[%c0_5, %c0_6] : memref<16x1xf32, #tpu.memory_space<vmem>>, vector<16x1xf32>
    %31 = vector.broadcast %30 : vector<16x1xf32> to vector<16x8xf32>
    %32 = arith.mulf %29, %31 : vector<16x8xf32>
    %cst_7 = arith.constant dense<0.000000e+00> : vector<8xf32>
    %33 = vector.multi_reduction <add>, %32, %cst_7 [0] : vector<16x8xf32> to vector<8xf32>
    %34 = vector.shape_cast %33 : vector<8xf32> to vector<1x8xf32>
    %c0_8 = arith.constant 0 : index
    %c0_9 = arith.constant 0 : index
    %35 = memref.load %arg5[%c0_8, %c0_9] : memref<1x1xf32, #tpu.memory_space<smem>>
    %36 = vector.broadcast %35 : f32 to vector<1x8xf32>
    %37 = arith.addf %34, %36 : vector<1x8xf32>
    %c0_10 = arith.constant 0 : index
    %c0_11 = arith.constant 0 : index
    %38 = vector.load %arg6[%c0_10, %c0_11] : memref<1x8xf32, #tpu.memory_space<vmem>>, vector<1x8xf32>
    tpu.vector_store %arg6[%c0_10, %c0_11], %37 {strides = array<i32>} : memref<1x8xf32, #tpu.memory_space<vmem>>, vector<1x8xf32>,
    return
  }
  func.func @transform_0(%arg0: i32) -> (i32, i32) {
    %c0_i32 = arith.constant 0 : i32
    %c0_i32_0 = arith.constant 0 : i32
    return %c0_i32, %arg0 : i32, i32
  }
  func.func @transform_1(%arg0: i32) -> (i32, i32) {
    %c0_i32 = arith.constant 0 : i32
    %c0_i32_0 = arith.constant 0 : i32
    %c0_i32_1 = arith.constant 0 : i32
    return %c0_i32, %c0_i32_0 : i32, i32
  }
  func.func @transform_2(%arg0: i32) -> (i32, i32) {
    %c0_i32 = arith.constant 0 : i32
    %c0_i32_0 = arith.constant 0 : i32
    %c0_i32_1 = arith.constant 0 : i32
    return %c0_i32, %c0_i32_0 : i32, i32
  }
  func.func @transform_3(%arg0: i32) -> (i32, i32) {
    %c0_i32 = arith.constant 0 : i32
    %c0_i32_0 = arith.constant 0 : i32
    %c0_i32_1 = arith.constant 0 : i32
    return %c0_i32, %c0_i32_0 : i32, i32
  }
  func.func @transform_4(%arg0: i32) -> (i32, i32) {
    %c0_i32 = arith.constant 0 : i32
    %c0_i32_0 = arith.constant 0 : i32
    %c0_i32_1 = arith.constant 0 : i32
    return %c0_i32, %c0_i32_0 : i32, i32
  }
  func.func @transform_5(%arg0: i32) -> (i32, i32) {
    %c0_i32 = arith.constant 0 : i32
    %c0_i32_0 = arith.constant 0 : i32
    return %c0_i32, %arg0 : i32, i32
  }
}

</mosaic_0001>

<llo_original>
// kernel: tpu_custom_call.1
$region0: #{tpu_custom_call.1}
  #allocation0 [shape = 'u32[]', space=smem, size = 0x4, offset = 0x4, fixed_abs, tag = 'smem constant byte address 0x4 - core index']
  #allocation1 [shape = 'u32[144,128]{1,0:T(1,128)}', space=vmem, size = 0x12000, scoped, tag = 'internal scratch']
  #allocation2 [shape = 'f32[1,1]{1,0:T(1,128)S(6)}', space=smem, size = 0x200, scoped, tag = 'scoped memory for tpu_custom_call.1']
  %s0 = inlined_call_operand.vmem [shape: f32[4,8], index: 0, kind: input, shape index: {}]
  %s1 = inlined_call_operand.vmem [shape: f32[16,4], index: 1, kind: input, shape index: {}]
  %s2 = inlined_call_operand.vmem [shape: f32[16,1], index: 2, kind: input, shape index: {}]
  %s3 = inlined_call_operand.vmem [shape: f32[16,1], index: 3, kind: input, shape index: {}]
  %s4 = inlined_call_operand.<no memory space> [shape: f32[1,1], index: 4, kind: input, shape index: {}]
  %s5 = inlined_call_operand.hbm [shape: f32[1,8], index: 5, kind: output, shape index: {}]
  %s6 = sld [smem:[#allocation0]]
  $region30: #{tpu_custom_call.1} parent=0
    _
  %s8 = ssub.s32 1, %s6
  %s9 = scalar_select 0, %s8, %s6
  %10 = sst [smem:[#allocation2]] %s4
  $region1: #{tpu_custom_call.1} parent=0
    #allocation3 [shape = 'u8[512]{0}', space=vmem, size = 0x400, scoped, tag = 'output window, operand 0, single buffered']
    #allocation4 [shape = 's32[1]{0}', space=sflag, size = 0x4, scoped, tag = 'scoped memory for tpu_custom_call.1']
    %11 = vsyncpa [#allocation4], 0
    // Predicated region
    $region2: #{tpu_custom_call.1} parent=1 // pred_check
      _
    $region3: #{tpu_custom_call.1} parent=1 // pred_check_branch
      %13 = sbr.rel (0) target = $region5
    $region4: #{tpu_custom_call.1} parent=1 // pred_region
      _
    $region5: #{tpu_custom_call.1} parent=1 // pred_fallthru
      _
    // Predicated region
    $region6: #{tpu_custom_call.1} parent=1 // pred_check
      _
    $region7: #{tpu_custom_call.1} parent=1 // pred_check_branch
      %15 = sbr.rel (0) target = $region9
    $region8: #{tpu_custom_call.1} parent=1 // pred_region
      _
    $region9: #{tpu_custom_call.1} parent=1 // pred_fallthru
      _
    // Predicated region
    $region10: #{tpu_custom_call.1} parent=1 // pred_check
      _
    $region11: #{tpu_custom_call.1} parent=1 // pred_check_branch
      %17 = sbr.rel (0) target = $region13
    $region12: #{tpu_custom_call.1} parent=1 // pred_region
      _
    $region13: #{tpu_custom_call.1} parent=1 // pred_fallthru
      _
    // Predicated region
    $region14: #{tpu_custom_call.1} parent=1 // pred_check
      _
    $region15: #{tpu_custom_call.1} parent=1 // pred_check_branch
      %19 = sbr.rel (0) target = $region17
    $region16: #{tpu_custom_call.1} parent=1 // pred_region
      _
    $region17: #{tpu_custom_call.1} parent=1 // pred_fallthru
      _
    // Predicated region
    $region18: #{tpu_custom_call.1} parent=1 // pred_check
      _
    $region19: #{tpu_custom_call.1} parent=1 // pred_check_branch
      %21 = sbr.rel (0) target = $region21
    $region20: #{tpu_custom_call.1} parent=1 // pred_region
      _
    $region21: #{tpu_custom_call.1} parent=1 // pred_fallthru
      _
    %v22 = vld [vmem:[%s0] sm:$0xf]
    %v23 = vld [vmem:[%s1] sm:$0xff]
    %v24 = vld [vmem:[%s1 + $0x8] sm:$0xff]
    %v25 = vld [vmem:[%s2] sm:$0xff]
    %v26 = vld [vmem:[%s2 + $0x8] sm:$0xff]
    %28 = vset.pattern.permute.xlu0 0
    %29 = vperm.xlu0 %28, %v23
    %v30 = vpop.permute.xlu0 %29
    %33 = vset.pattern.permute.xlu0 0
    %34 = vperm.xlu0 %33, %v24
    %v35 = vpop.permute.xlu0 %34
    %v37 = vlaneseq
    %v38 = vshrl.u32 %v37, 7
    %v39 = vsub.s32 0, %v38
    %v40 = vrot.slane %v22, %v39
    %v41 = vmul.f32 %v30, %v40
    %v42 = vmul.f32 %v35, %v40
    %44 = vset.pattern.permute.xlu0 0
    %45 = vperm.xlu0 %44, %v25
    %v46 = vpop.permute.xlu0 %45
    %49 = vset.pattern.permute.xlu0 0
    %50 = vperm.xlu0 %49, %v26
    %v51 = vpop.permute.xlu0 %50
    %v53 = vadd.f32 %v46, %v41
    %v54 = vadd.f32 %v51, %v42
    %55 = vset.pattern.permute.xlu0 1
    %56 = vperm.xlu0 %55, %v23
    %v57 = vpop.permute.xlu0 %56
    %59 = vset.pattern.permute.xlu0 1
    %60 = vperm.xlu0 %59, %v24
    %v61 = vpop.permute.xlu0 %60
    %v63 = vlaneseq
    %v64 = vshrl.u32 %v63, 7
    %v65 = vsub.s32 1, %v64
    %v66 = vrot.slane %v22, %v65
    %v67 = vmul.f32 %v57, %v66
    %v68 = vmul.f32 %v61, %v66
    %v69 = vadd.f32 %v53, %v67
    %v70 = vadd.f32 %v54, %v68
    %71 = vset.pattern.permute.xlu0 2
    %72 = vperm.xlu0 %71, %v23
    %v73 = vpop.permute.xlu0 %72
    %75 = vset.pattern.permute.xlu0 2
    %76 = vperm.xlu0 %75, %v24
    %v77 = vpop.permute.xlu0 %76
    %v79 = vlaneseq
    %v80 = vshrl.u32 %v79, 7
    %v81 = vsub.s32 2, %v80
    %v82 = vrot.slane %v22, %v81
    %v83 = vmul.f32 %v73, %v82
    %v84 = vmul.f32 %v77, %v82
    %v85 = vadd.f32 %v69, %v83
    %v86 = vadd.f32 %v70, %v84
    %87 = vset.pattern.permute.xlu0 3
    %88 = vperm.xlu0 %87, %v23
    %v89 = vpop.permute.xlu0 %88
    %91 = vset.pattern.permute.xlu0 3
    %92 = vperm.xlu0 %91, %v24
    %v93 = vpop.permute.xlu0 %92
    %v95 = vlaneseq
    %v96 = vshrl.u32 %v95, 7
    %v97 = vsub.s32 3, %v96
    %v98 = vrot.slane %v22, %v97
    %v99 = vmul.f32 %v89, %v98
    %v100 = vmul.f32 %v93, %v98
    %v101 = vadd.f32 %v85, %v99
    %v102 = vadd.f32 %v86, %v100
    %v103 = vmax.f32 %v101, 0.0
    %v104 = vmax.f32 %v102, 0.0
    %v105 = vld [vmem:[%s3] sm:$0xff]
    %v106 = vld [vmem:[%s3 + $0x8] sm:$0xff]
    %108 = vset.pattern.permute.xlu0 0
    %109 = vperm.xlu0 %108, %v105
    %v110 = vpop.permute.xlu0 %109
    %113 = vset.pattern.permute.xlu0 0
    %114 = vperm.xlu0 %113, %v106
    %v115 = vpop.permute.xlu0 %114
    %v117 = vmul.f32 %v103, %v110
    %v118 = vmul.f32 %v104, %v115
    %vm119 = vcmask 64512
    %v120 = vsel %vm119, %v117, 0.0
    %v121 = vsel %vm119, %v118, 0.0
    %v122 = vadd.f32 %v120, %v121
    %v123 = vrot.slane %v122, 4
    %v124 = vadd.f32 %v122, %v123
    %v125 = vrot.slane %v124, 2
    %v126 = vadd.f32 %v124, %v125
    %v127 = vrot.slane %v126, 1
    %v128 = vadd.f32 %v126, %v127
    %s129 = sld [smem:[#allocation2]]
    %v130 = vstv %s129
    %v131 = vadd.f32 %v128, %v130
    %vm132 = vcmask 57344
    %133 = vst.msk [vmem:[#allocation3] sm:$0x1] %vm132, %v131
    // Predicated region
    $region22: #{tpu_custom_call.1} parent=1 // pred_check
      _
    $region23: #{tpu_custom_call.1} parent=1 // pred_check_branch
      %135 = sbr.rel (0) target = $region25
    $region24: #{tpu_custom_call.1} parent=1 // pred_region
      %s137 = ssub.s32 16, 16
      %138 = vsyncadd [#allocation4], %s137
      %s140 = sshll.u32 [#allocation3], 4
      %s141 = int_to_ptr.vmem [resolvable:$true] %s140
      %143 = dma.vmem_to_hbm [thread:$0]  %s141, 16, %s5, [#allocation4]
    $region25: #{tpu_custom_call.1} parent=1 // pred_fallthru
      _
    // Predicated region
    $region26: #{tpu_custom_call.1} parent=1 // pred_check
      _
    $region27: #{tpu_custom_call.1} parent=1 // pred_check_branch
      %145 = sbr.rel (0) target = $region29
    $region28: #{tpu_custom_call.1} parent=1 // pred_region
      %146 = dma.done [#allocation4], 16
    $region29: #{tpu_custom_call.1} parent=1 // pred_fallthru
      _
    %147 = vsyncpa [#allocation4], 1

</llo_original>
